<compile_context>
chip_gen: v7x
topology: tpu7x:2x2x1
jax: 0.10.0
libtpu: 0.0.40
codegen_flags: <defaults>
</compile_context>

<pallas_src>
import jax
import jax.numpy as jnp
from jax.experimental import pallas as pl
from jax.experimental.pallas import tpu as pltpu


def _round_up(a, m):
    return (a + m - 1) // m * m


def autoencoder_kernel(
    x_ref,                 # [TB, D]  f32 input tile
    w1_ref, b1_ref,        # [D, H] bf16, [1, H] f32   encoder layer 1
    w2_ref, b2_ref,        # [H, Z] bf16, [1, Z] f32   encoder layer 2 (latent)
    mu_t_ref, mu_sq_ref,   # [Z, K] f32,  [1, K] f32   centroids^T, |mu|^2 (precomputed)
    w3_ref, b3_ref,        # [Z, H] bf16, [1, H] f32   decoder layer 1
    w4_ref, b4_ref,        # [H, Dp] bf16, [1, Dp] f32 decoder layer 2 (cols padded to 128)
    xrec_ref,              # [TB, Dp] f32  reconstruction (lane-dense)
    qz_ref,                # [TB, P]  f32  packed outputs: lanes [0:K]=q, [K:K+Z]=z
):
    # ---- encoder: bf16 MXU matmuls, f32 accumulation ----
    x = x_ref[...].astype(jnp.bfloat16)
    h1 = jnp.dot(x, w1_ref[...], preferred_element_type=jnp.float32) + b1_ref[...]
    h1 = jnp.maximum(h1, 0.0)
    z = (jnp.dot(h1.astype(jnp.bfloat16), w2_ref[...],
                 preferred_element_type=jnp.float32) + b2_ref[...])

    # ---- DEC clustering layer (Student's t, alpha = 1), kept in f32 ----
    z_sq = jnp.sum(z * z, axis=-1, keepdims=True)                           # [TB, 1]
    cross = jnp.dot(z, mu_t_ref[...], preferred_element_type=jnp.float32)   # [TB, K]
    d2 = jnp.maximum(z_sq - 2.0 * cross + mu_sq_ref[...], 0.0)              # fp guard
    q = 1.0 / (1.0 + d2)
    q = q * pl.reciprocal(jnp.sum(q, axis=-1, keepdims=True), approx=True)

    # pack q and z into one lane-dense 128-wide output slab (single HBM tile)
    K = q.shape[1]
    Z = z.shape[1]
    qz_ref[...] = jnp.zeros(qz_ref.shape, qz_ref.dtype)
    qz_ref[:, 0:K] = q
    qz_ref[:, K:K + Z] = z

    # ---- decoder ----
    h2 = (jnp.dot(z.astype(jnp.bfloat16), w3_ref[...],
                  preferred_element_type=jnp.float32) + b3_ref[...])
    h2 = jnp.maximum(h2, 0.0)
    xrec_ref[...] = (jnp.dot(h2.astype(jnp.bfloat16), w4_ref[...],
                             preferred_element_type=jnp.float32) + b4_ref[...])


def autoencoder_forward(x, params, *, max_batch_tile=256):
    """x: [B, C, L] float32 -> (x_rec [B, C, L], q [B, K], z [B, Z])."""
    B, C, L = x.shape
    D = C * L
    w1, b1, w2, b2, mu_t, w3, b3, w4, b4 = params
    H = w1.shape[1]
    Z = w2.shape[1]
    K = mu_t.shape[1]

    # Tile sizes: TB multiple of 8 (sublane), capped so VMEM stays comfortable on v7x.
    TB = min(max_batch_tile, _round_up(B, 8))
    Bp = _round_up(B, TB)          # padded batch
    Dp = _round_up(D, 128)         # lane-dense reconstruction output
    P = _round_up(K + Z, 128)      # packed (q, z) output slab width

    x_flat = x.reshape(B, D)
    if Bp != B:
        x_flat = jnp.pad(x_flat, ((0, Bp - B), (0, 0)))

    # Weights cast to bf16 once (MXU-native); biases stay f32 (added post-accum).
    # w4/b4 columns zero-padded so the x_rec store is an unmasked 128-lane tile.
    w1b = w1.astype(jnp.bfloat16)
    w2b = w2.astype(jnp.bfloat16)
    w3b = w3.astype(jnp.bfloat16)
    w4b = jnp.pad(w4, ((0, 0), (0, Dp - D))).astype(jnp.bfloat16)
    b4p = jnp.pad(b4, ((0, 0), (0, Dp - D)))
    # Batch-invariant centroid norms hoisted out of the kernel.
    mu_sq = jnp.sum(mu_t * mu_t, axis=0, keepdims=True)

    tile = lambda i: (i, 0)        # per-batch-tile blocks
    const = lambda i: (0, 0)       # weights stay resident across grid steps

    xrec_p, qz = pl.pallas_call(
        autoencoder_kernel,
        grid=(Bp // TB,),
        in_specs=[
            pl.BlockSpec((TB, D), tile),
            pl.BlockSpec((D, H), const), pl.BlockSpec((1, H), const),
            pl.BlockSpec((H, Z), const), pl.BlockSpec((1, Z), const),
            pl.BlockSpec((Z, K), const), pl.BlockSpec((1, K), const),
            pl.BlockSpec((Z, H), const), pl.BlockSpec((1, H), const),
            pl.BlockSpec((H, Dp), const), pl.BlockSpec((1, Dp), const),
        ],
        out_specs=(
            pl.BlockSpec((TB, Dp), tile),
            pl.BlockSpec((TB, P), tile),
        ),
        out_shape=(
            jax.ShapeDtypeStruct((Bp, Dp), jnp.float32),
            jax.ShapeDtypeStruct((Bp, P), jnp.float32),
        ),
        compiler_params=pltpu.CompilerParams(
            dimension_semantics=("parallel",),   # megacore sharding on v7x
        ),
    )(x_flat, w1b, b1, w2b, b2, mu_t, mu_sq, w3b, b3, w4b, b4p)

    x_rec = xrec_p[:B, :D].reshape(B, C, L)
    q = qz[:B, :K]
    z = qz[:B, K:K + Z]
    return x_rec, q, z


def init_params(key, D, H, Z, K):
    ks = jax.random.split(key, 9)
    scale = 0.1
    w1 = scale * jax.random.normal(ks[0], (D, H), jnp.float32)
    b1 = scale * jax.random.normal(ks[1], (1, H), jnp.float32)
    w2 = scale * jax.random.normal(ks[2], (H, Z), jnp.float32)
    b2 = scale * jax.random.normal(ks[3], (1, Z), jnp.float32)
    mu_t = scale * jax.random.normal(ks[4], (Z, K), jnp.float32)  # centroids^T
    w3 = scale * jax.random.normal(ks[5], (Z, H), jnp.float32)
    b3 = scale * jax.random.normal(ks[6], (1, H), jnp.float32)
    w4 = scale * jax.random.normal(ks[7], (H, D), jnp.float32)
    b4 = scale * jax.random.normal(ks[8], (1, D), jnp.float32)
    return (w1, b1, w2, b2, mu_t, w3, b3, w4, b4)


if __name__ == "__main__":
    # NOTE: at these toy sizes the kernel is pure fixed overhead; the tiling /
    # bf16 / lane-density choices pay off once B, D, H reach MXU-relevant sizes.
    B, C, L = 2, 4, 16          # input [B, C, L] -> flattened D = 64
    H, Z, K = 32, 8, 3          # hidden, latent dim, num_clusters

    key = jax.random.PRNGKey(0)
    k_x, k_p = jax.random.split(key)
    x = jax.random.normal(k_x, (B, C, L), jnp.float32)
    params = init_params(k_p, C * L, H, Z, K)

    x_rec, clustering_out, z = jax.jit(autoencoder_forward)(x, params)
    jax.block_until_ready((x_rec, clustering_out, z))

    assert x_rec.shape == (B, C, L)
    assert clustering_out.shape == (B, K)
    assert z.shape == (B, Z)
    # soft assignments sum to 1 per row (approx reciprocal -> relaxed tolerance)
    assert jnp.allclose(jnp.sum(clustering_out, axis=-1), 1.0, atol=5e-3)
    assert jnp.all(jnp.isfinite(x_rec)) and jnp.all(jnp.isfinite(z))

    print("KERNEL_OK")
</pallas_src>

<mosaic_0001>
module attributes {stable_mosaic.version = 11 : i64} {
  func.func @autoencoder_kernel(%arg0: i32, %arg1: memref<8x64xf32, #tpu.memory_space<vmem>>, %arg2: memref<64x32xbf16, #tpu.memory_space<vmem>>, %arg3: memref<1x32xf32, #tpu.memory_space<vmem>>, %arg4: memref<32x8xbf16, #tpu.memory_space<vmem>>, %arg5: memref<1x8xf32, #tpu.memory_space<vmem>>, %arg6: memref<8x3xf32, #tpu.memory_space<vmem>>, %arg7: memref<1x3xf32, #tpu.memory_space<vmem>>, %arg8: memref<8x32xbf16, #tpu.memory_space<vmem>>, %arg9: memref<1x32xf32, #tpu.memory_space<vmem>>, %arg10: memref<32x128xbf16, #tpu.memory_space<vmem>>, %arg11: memref<1x128xf32, #tpu.memory_space<vmem>>, %arg12: memref<8x128xf32, #tpu.memory_space<vmem>>, %arg13: memref<8x128xf32, #tpu.memory_space<vmem>>) attributes {dimension_semantics = [#tpu.dimension_semantics<parallel>], iteration_bounds = array<i64: 1>, scalar_prefetch = 0 : i64, scratch_operands = 0 : i64, tpu.core_type = #tpu.core_type<tc>, window_params = [{transform_indices = @transform_0, window_bounds = array<i64: 8, 64>}, {pipeline_mode = #tpu.pipeline_mode<synchronous>, transform_indices = @transform_1, window_bounds = array<i64: 64, 32>}, {pipeline_mode = #tpu.pipeline_mode<synchronous>, transform_indices = @transform_2, window_bounds = array<i64: 1, 32>}, {pipeline_mode = #tpu.pipeline_mode<synchronous>, transform_indices = @transform_3, window_bounds = array<i64: 32, 8>}, {pipeline_mode = #tpu.pipeline_mode<synchronous>, transform_indices = @transform_4, window_bounds = array<i64: 1, 8>}, {pipeline_mode = #tpu.pipeline_mode<synchronous>, transform_indices = @transform_5, window_bounds = array<i64: 8, 3>}, {pipeline_mode = #tpu.pipeline_mode<synchronous>, transform_indices = @transform_6, window_bounds = array<i64: 1, 3>}, {pipeline_mode = #tpu.pipeline_mode<synchronous>, transform_indices = @transform_7, window_bounds = array<i64: 8, 32>}, {pipeline_mode = #tpu.pipeline_mode<synchronous>, transform_indices = @transform_8, window_bounds = array<i64: 1, 32>}, {pipeline_mode = #tpu.pipeline_mode<synchronous>, transform_indices = @transform_9, window_bounds = array<i64: 32, 128>}, {pipeline_mode = #tpu.pipeline_mode<synchronous>, transform_indices = @transform_10, window_bounds = array<i64: 1, 128>}, {transform_indices = @transform_11, window_bounds = array<i64: 8, 128>}, {transform_indices = @transform_12, window_bounds = array<i64: 8, 128>}]} {
    %c0 = arith.constant 0 : index
    %c0_0 = arith.constant 0 : index
    %0 = vector.load %arg1[%c0, %c0_0] : memref<8x64xf32, #tpu.memory_space<vmem>>, vector<8x64xf32>
    %1 = arith.truncf %0 : vector<8x64xf32> to vector<8x64xbf16>
    %c0_1 = arith.constant 0 : index
    %c0_2 = arith.constant 0 : index
    %2 = vector.load %arg2[%c0_1, %c0_2] : memref<64x32xbf16, #tpu.memory_space<vmem>>, vector<64x32xbf16>
    %cst = arith.constant dense<0.000000e+00> : vector<8x32xf32>
    %3 = tpu.matmul %1, %2, %cst {dimension_numbers = #tpu.dot_dimension_numbers<[1], [0], [0], [1], [0, 0, 1, 1], [], []>} : vector<8x64xbf16>, vector<64x32xbf16>, vector<8x32xf32> -> vector<8x32xf32>
    %c0_3 = arith.constant 0 : index
    %c0_4 = arith.constant 0 : index
    %4 = vector.load %arg3[%c0_3, %c0_4] : memref<1x32xf32, #tpu.memory_space<vmem>>, vector<1x32xf32>
    %5 = vector.broadcast %4 : vector<1x32xf32> to vector<8x32xf32>
    %6 = arith.addf %3, %5 : vector<8x32xf32>
    %cst_5 = arith.constant 0.000000e+00 : f32
    %7 = vector.broadcast %cst_5 : f32 to vector<8x32xf32>
    %8 = arith.maximumf %6, %7 : vector<8x32xf32>
    %9 = arith.truncf %8 : vector<8x32xf32> to vector<8x32xbf16>
    %c0_6 = arith.constant 0 : index
    %c0_7 = arith.constant 0 : index
    %10 = vector.load %arg4[%c0_6, %c0_7] : memref<32x8xbf16, #tpu.memory_space<vmem>>, vector<32x8xbf16>
    %cst_8 = arith.constant dense<0.000000e+00> : vector<8x8xf32>
    %11 = tpu.matmul %9, %10, %cst_8 {dimension_numbers = #tpu.dot_dimension_numbers<[1], [0], [0], [1], [0, 0, 1, 1], [], []>} : vector<8x32xbf16>, vector<32x8xbf16>, vector<8x8xf32> -> vector<8x8xf32>
    %c0_9 = arith.constant 0 : index
    %c0_10 = arith.constant 0 : index
    %12 = vector.load %arg5[%c0_9, %c0_10] : memref<1x8xf32, #tpu.memory_space<vmem>>, vector<1x8xf32>
    %13 = vector.broadcast %12 : vector<1x8xf32> to vector<8x8xf32>
    %14 = arith.addf %11, %13 : vector<8x8xf32>
    %15 = arith.mulf %14, %14 : vector<8x8xf32>
    %cst_11 = arith.constant dense<0.000000e+00> : vector<8xf32>
    %16 = vector.multi_reduction <add>, %15, %cst_11 [1] : vector<8x8xf32> to vector<8xf32>
    %17 = vector.shape_cast %16 : vector<8xf32> to vector<8x1xf32>
    %c0_12 = arith.constant 0 : index
    %c0_13 = arith.constant 0 : index
    %18 = vector.load %arg6[%c0_12, %c0_13] : memref<8x3xf32, #tpu.memory_space<vmem>>, vector<8x3xf32>
    %cst_14 = arith.constant dense<0.000000e+00> : vector<8x3xf32>
    %19 = tpu.matmul %14, %18, %cst_14 {dimension_numbers = #tpu.dot_dimension_numbers<[1], [0], [0], [1], [0, 0, 1, 1], [], []>} : vector<8x8xf32>, vector<8x3xf32>, vector<8x3xf32> -> vector<8x3xf32>
    %cst_15 = arith.constant 2.000000e+00 : f32
    %20 = vector.broadcast %cst_15 : f32 to vector<8x3xf32>
    %21 = arith.mulf %20, %19 : vector<8x3xf32>
    %22 = vector.broadcast %17 : vector<8x1xf32> to vector<8x3xf32>
    %23 = arith.subf %22, %21 : vector<8x3xf32>
    %c0_16 = arith.constant 0 : index
    %c0_17 = arith.constant 0 : index
    %24 = vector.load %arg7[%c0_16, %c0_17] : memref<1x3xf32, #tpu.memory_space<vmem>>, vector<1x3xf32>
    %25 = vector.broadcast %24 : vector<1x3xf32> to vector<8x3xf32>
    %26 = arith.addf %23, %25 : vector<8x3xf32>
    %cst_18 = arith.constant 0.000000e+00 : f32
    %27 = vector.broadcast %cst_18 : f32 to vector<8x3xf32>
    %28 = arith.maximumf %26, %27 : vector<8x3xf32>
    %cst_19 = arith.constant 1.000000e+00 : f32
    %29 = vector.broadcast %cst_19 : f32 to vector<8x3xf32>
    %30 = arith.addf %29, %28 : vector<8x3xf32>
    %cst_20 = arith.constant 1.000000e+00 : f32
    %31 = vector.broadcast %cst_20 : f32 to vector<8x3xf32>
    %32 = arith.divf %31, %30 : vector<8x3xf32>
    %cst_21 = arith.constant dense<0.000000e+00> : vector<8xf32>
    %33 = vector.multi_reduction <add>, %32, %cst_21 [1] : vector<8x3xf32> to vector<8xf32>
    %34 = vector.shape_cast %33 : vector<8xf32> to vector<8x1xf32>
    %35 = tpu.reciprocal %34 {approx = true} : vector<8x1xf32> -> vector<8x1xf32>
    %36 = vector.broadcast %35 : vector<8x1xf32> to vector<8x3xf32>
    %37 = arith.mulf %32, %36 : vector<8x3xf32>
    %cst_22 = arith.constant 0.000000e+00 : f32
    %38 = vector.broadcast %cst_22 : f32 to vector<8x128xf32>
    %c0_23 = arith.constant 0 : index
    %c0_24 = arith.constant 0 : index
    %39 = vector.load %arg13[%c0_23, %c0_24] : memref<8x128xf32, #tpu.memory_space<vmem>>, vector<8x128xf32>
    tpu.vector_store %arg13[%c0_23, %c0_24], %38 {strides = array<i32>} : memref<8x128xf32, #tpu.memory_space<vmem>>, vector<8x128xf32>,
    %c0_25 = arith.constant 0 : index
    %c0_26 = arith.constant 0 : index
    %40 = vector.load %arg13[%c0_25, %c0_26] : memref<8x128xf32, #tpu.memory_space<vmem>>, vector<8x3xf32>
    tpu.vector_store %arg13[%c0_25, %c0_26], %37 {strides = array<i32>} : memref<8x128xf32, #tpu.memory_space<vmem>>, vector<8x3xf32>,
    %c0_27 = arith.constant 0 : index
    %c3 = arith.constant 3 : index
    %41 = vector.load %arg13[%c0_27, %c3] : memref<8x128xf32, #tpu.memory_space<vmem>>, vector<8x8xf32>
    tpu.vector_store %arg13[%c0_27, %c3], %14 {strides = array<i32>} : memref<8x128xf32, #tpu.memory_space<vmem>>, vector<8x8xf32>,
    %42 = arith.truncf %14 : vector<8x8xf32> to vector<8x8xbf16>
    %c0_28 = arith.constant 0 : index
    %c0_29 = arith.constant 0 : index
    %43 = vector.load %arg8[%c0_28, %c0_29] : memref<8x32xbf16, #tpu.memory_space<vmem>>, vector<8x32xbf16>
    %cst_30 = arith.constant dense<0.000000e+00> : vector<8x32xf32>
    %44 = tpu.matmul %42, %43, %cst_30 {dimension_numbers = #tpu.dot_dimension_numbers<[1], [0], [0], [1], [0, 0, 1, 1], [], []>} : vector<8x8xbf16>, vector<8x32xbf16>, vector<8x32xf32> -> vector<8x32xf32>
    %c0_31 = arith.constant 0 : index
    %c0_32 = arith.constant 0 : index
    %45 = vector.load %arg9[%c0_31, %c0_32] : memref<1x32xf32, #tpu.memory_space<vmem>>, vector<1x32xf32>
    %46 = vector.broadcast %45 : vector<1x32xf32> to vector<8x32xf32>
    %47 = arith.addf %44, %46 : vector<8x32xf32>
    %cst_33 = arith.constant 0.000000e+00 : f32
    %48 = vector.broadcast %cst_33 : f32 to vector<8x32xf32>
    %49 = arith.maximumf %47, %48 : vector<8x32xf32>
    %50 = arith.truncf %49 : vector<8x32xf32> to vector<8x32xbf16>
    %c0_34 = arith.constant 0 : index
    %c0_35 = arith.constant 0 : index
    %51 = vector.load %arg10[%c0_34, %c0_35] : memref<32x128xbf16, #tpu.memory_space<vmem>>, vector<32x128xbf16>
    %cst_36 = arith.constant dense<0.000000e+00> : vector<8x128xf32>
    %52 = tpu.matmul %50, %51, %cst_36 {dimension_numbers = #tpu.dot_dimension_numbers<[1], [0], [0], [1], [0, 0, 1, 1], [], []>} : vector<8x32xbf16>, vector<32x128xbf16>, vector<8x128xf32> -> vector<8x128xf32>
    %c0_37 = arith.constant 0 : index
    %c0_38 = arith.constant 0 : index
    %53 = vector.load %arg11[%c0_37, %c0_38] : memref<1x128xf32, #tpu.memory_space<vmem>>, vector<1x128xf32>
    %54 = vector.broadcast %53 : vector<1x128xf32> to vector<8x128xf32>
    %55 = arith.addf %52, %54 : vector<8x128xf32>
    %c0_39 = arith.constant 0 : index
    %c0_40 = arith.constant 0 : index
    %56 = vector.load %arg12[%c0_39, %c0_40] : memref<8x128xf32, #tpu.memory_space<vmem>>, vector<8x128xf32>
    tpu.vector_store %arg12[%c0_39, %c0_40], %55 {strides = array<i32>} : memref<8x128xf32, #tpu.memory_space<vmem>>, vector<8x128xf32>,
    return
  }
  func.func @transform_0(%arg0: i32) -> (i32, i32) {
    %c0_i32 = arith.constant 0 : i32
    %c0_i32_0 = arith.constant 0 : i32
    return %arg0, %c0_i32 : i32, i32
  }
  func.func @transform_1(%arg0: i32) -> (i32, i32) {
    %c0_i32 = arith.constant 0 : i32
    %c0_i32_0 = arith.constant 0 : i32
    %c0_i32_1 = arith.constant 0 : i32
    return %c0_i32, %c0_i32_0 : i32, i32
  }
  func.func @transform_2(%arg0: i32) -> (i32, i32) {
    %c0_i32 = arith.constant 0 : i32
    %c0_i32_0 = arith.constant 0 : i32
    %c0_i32_1 = arith.constant 0 : i32
    return %c0_i32, %c0_i32_0 : i32, i32
  }
  func.func @transform_3(%arg0: i32) -> (i32, i32) {
    %c0_i32 = arith.constant 0 : i32
    %c0_i32_0 = arith.constant 0 : i32
    %c0_i32_1 = arith.constant 0 : i32
    return %c0_i32, %c0_i32_0 : i32, i32
  }
  func.func @transform_4(%arg0: i32) -> (i32, i32) {
    %c0_i32 = arith.constant 0 : i32
    %c0_i32_0 = arith.constant 0 : i32
    %c0_i32_1 = arith.constant 0 : i32
    return %c0_i32, %c0_i32_0 : i32, i32
  }
  func.func @transform_5(%arg0: i32) -> (i32, i32) {
    %c0_i32 = arith.constant 0 : i32
    %c0_i32_0 = arith.constant 0 : i32
    %c0_i32_1 = arith.constant 0 : i32
    return %c0_i32, %c0_i32_0 : i32, i32
  }
  func.func @transform_6(%arg0: i32) -> (i32, i32) {
    %c0_i32 = arith.constant 0 : i32
    %c0_i32_0 = arith.constant 0 : i32
    %c0_i32_1 = arith.constant 0 : i32
    return %c0_i32, %c0_i32_0 : i32, i32
  }
  func.func @transform_7(%arg0: i32) -> (i32, i32) {
    %c0_i32 = arith.constant 0 : i32
    %c0_i32_0 = arith.constant 0 : i32
    %c0_i32_1 = arith.constant 0 : i32
    return %c0_i32, %c0_i32_0 : i32, i32
  }
  func.func @transform_8(%arg0: i32) -> (i32, i32) {
    %c0_i32 = arith.constant 0 : i32
    %c0_i32_0 = arith.constant 0 : i32
    %c0_i32_1 = arith.constant 0 : i32
    return %c0_i32, %c0_i32_0 : i32, i32
  }
  func.func @transform_9(%arg0: i32) -> (i32, i32) {
    %c0_i32 = arith.constant 0 : i32
    %c0_i32_0 = arith.constant 0 : i32
    %c0_i32_1 = arith.constant 0 : i32
    return %c0_i32, %c0_i32_0 : i32, i32
  }
  func.func @transform_10(%arg0: i32) -> (i32, i32) {
    %c0_i32 = arith.constant 0 : i32
    %c0_i32_0 = arith.constant 0 : i32
    %c0_i32_1 = arith.constant 0 : i32
    return %c0_i32, %c0_i32_0 : i32, i32
  }
  func.func @transform_11(%arg0: i32) -> (i32, i32) {
    %c0_i32 = arith.constant 0 : i32
    %c0_i32_0 = arith.constant 0 : i32
    return %arg0, %c0_i32 : i32, i32
  }
  func.func @transform_12(%arg0: i32) -> (i32, i32) {
    %c0_i32 = arith.constant 0 : i32
    %c0_i32_0 = arith.constant 0 : i32
    return %arg0, %c0_i32 : i32, i32
  }
}

</mosaic_0001>

<llo_original>
// kernel: autoencoder_forward.1
$region0: #{autoencoder_forward.1}
  #allocation0 [shape = 'u32[]', space=smem, size = 0x4, offset = 0x4, fixed_abs, tag = 'smem constant byte address 0x4 - core index']
  #allocation1 [shape = 'u32[144,128]{1,0:T(1,128)}', space=vmem, size = 0x12000, scoped, tag = 'internal scratch']
  %s0 = inlined_call_operand.vmem [shape: f32[8,64], index: 0, kind: input, shape index: {}]
  %s1 = inlined_call_operand.vmem [shape: bf16[64,32], index: 1, kind: input, shape index: {}]
  %s2 = inlined_call_operand.vmem [shape: f32[1,32], index: 2, kind: input, shape index: {}]
  %s3 = inlined_call_operand.vmem [shape: bf16[32,8], index: 3, kind: input, shape index: {}]
  %s4 = inlined_call_operand.vmem [shape: f32[1,8], index: 4, kind: input, shape index: {}]
  %s5 = inlined_call_operand.vmem [shape: f32[8,3], index: 5, kind: input, shape index: {}]
  %s6 = inlined_call_operand.vmem [shape: f32[1,3], index: 6, kind: input, shape index: {}]
  %s7 = inlined_call_operand.vmem [shape: bf16[8,32], index: 7, kind: input, shape index: {}]
  %s8 = inlined_call_operand.vmem [shape: f32[1,32], index: 8, kind: input, shape index: {}]
  %s9 = inlined_call_operand.vmem [shape: bf16[32,128], index: 9, kind: input, shape index: {}]
  %s10 = inlined_call_operand.vmem [shape: f32[1,128], index: 10, kind: input, shape index: {}]
  %s11 = inlined_call_operand.vmem [shape: f32[8,128], index: 11, kind: output, shape index: {0}]
  %s12 = inlined_call_operand.vmem [shape: f32[8,128], index: 12, kind: output, shape index: {1}]
  %13 = xla_tuple %s11, %s12
  %s14 = sld [smem:[#allocation0]]
  $region62: #{autoencoder_forward.1} parent=0
    _
  %s16 = ssub.s32 1, %s14
  %s17 = scalar_select 0, %s16, %s14
  // Predicated region
  $region2: #{autoencoder_forward.1} parent=0 // pred_check
    _
  $region3: #{autoencoder_forward.1} parent=0 // pred_check_branch
    %19 = sbr.rel (0) target = $region5
  $region4: #{autoencoder_forward.1} parent=0 // pred_region
    _
  $region5: #{autoencoder_forward.1} parent=0 // pred_fallthru
    _
  // Predicated region
  $region6: #{autoencoder_forward.1} parent=0 // pred_check
    _
  $region7: #{autoencoder_forward.1} parent=0 // pred_check_branch
    %21 = sbr.rel (0) target = $region9
  $region8: #{autoencoder_forward.1} parent=0 // pred_region
    _
  $region9: #{autoencoder_forward.1} parent=0 // pred_fallthru
    _
  // Predicated region
  $region10: #{autoencoder_forward.1} parent=0 // pred_check
    _
  $region11: #{autoencoder_forward.1} parent=0 // pred_check_branch
    %23 = sbr.rel (0) target = $region13
  $region12: #{autoencoder_forward.1} parent=0 // pred_region
    _
  $region13: #{autoencoder_forward.1} parent=0 // pred_fallthru
    _
  // Predicated region
  $region14: #{autoencoder_forward.1} parent=0 // pred_check
    _
  $region15: #{autoencoder_forward.1} parent=0 // pred_check_branch
    %25 = sbr.rel (0) target = $region17
  $region16: #{autoencoder_forward.1} parent=0 // pred_region
    _
  $region17: #{autoencoder_forward.1} parent=0 // pred_fallthru
    _
  // Predicated region
  $region18: #{autoencoder_forward.1} parent=0 // pred_check
    _
  $region19: #{autoencoder_forward.1} parent=0 // pred_check_branch
    %27 = sbr.rel (0) target = $region21
  $region20: #{autoencoder_forward.1} parent=0 // pred_region
    _
  $region21: #{autoencoder_forward.1} parent=0 // pred_fallthru
    _
  // Predicated region
  $region22: #{autoencoder_forward.1} parent=0 // pred_check
    _
  $region23: #{autoencoder_forward.1} parent=0 // pred_check_branch
    %29 = sbr.rel (0) target = $region25
  $region24: #{autoencoder_forward.1} parent=0 // pred_region
    _
  $region25: #{autoencoder_forward.1} parent=0 // pred_fallthru
    _
  // Predicated region
  $region26: #{autoencoder_forward.1} parent=0 // pred_check
    _
  $region27: #{autoencoder_forward.1} parent=0 // pred_check_branch
    %31 = sbr.rel (0) target = $region29
  $region28: #{autoencoder_forward.1} parent=0 // pred_region
    _
  $region29: #{autoencoder_forward.1} parent=0 // pred_fallthru
    _
  // Predicated region
  $region30: #{autoencoder_forward.1} parent=0 // pred_check
    _
  $region31: #{autoencoder_forward.1} parent=0 // pred_check_branch
    %33 = sbr.rel (0) target = $region33
  $region32: #{autoencoder_forward.1} parent=0 // pred_region
    _
  $region33: #{autoencoder_forward.1} parent=0 // pred_fallthru
    _
  // Predicated region
  $region34: #{autoencoder_forward.1} parent=0 // pred_check
    _
  $region35: #{autoencoder_forward.1} parent=0 // pred_check_branch
    %35 = sbr.rel (0) target = $region37
  $region36: #{autoencoder_forward.1} parent=0 // pred_region
    _
  $region37: #{autoencoder_forward.1} parent=0 // pred_fallthru
    _
  // Predicated region
  $region38: #{autoencoder_forward.1} parent=0 // pred_check
    _
  $region39: #{autoencoder_forward.1} parent=0 // pred_check_branch
    %37 = sbr.rel (0) target = $region41
  $region40: #{autoencoder_forward.1} parent=0 // pred_region
    _
  $region41: #{autoencoder_forward.1} parent=0 // pred_fallthru
    _
  // Predicated region
  $region42: #{autoencoder_forward.1} parent=0 // pred_check
    _
  $region43: #{autoencoder_forward.1} parent=0 // pred_check_branch
    %39 = sbr.rel (0) target = $region45
  $region44: #{autoencoder_forward.1} parent=0 // pred_region
    _
  $region45: #{autoencoder_forward.1} parent=0 // pred_fallthru
    _
  %v41 = vld [vmem:[%s0] sm:$0xff]
  %v42 = vpack.c.bf16 %v41, %v41
  %v43 = vld [vmem:[%s1] sm:$0xf]
  %v44 = vld [vmem:[%s1 + $0x4] sm:$0xf]
  %v45 = vld [vmem:[%s1 + $0x8] sm:$0xf]
  %v46 = vld [vmem:[%s1 + $0xc] sm:$0xf]
  %v47 = vld [vmem:[%s1 + $0x10] sm:$0xf]
  %v48 = vld [vmem:[%s1 + $0x14] sm:$0xf]
  %v49 = vld [vmem:[%s1 + $0x18] sm:$0xf]
  %v50 = vld [vmem:[%s1 + $0x1c] sm:$0xf]
  %v51 = vld [vmem:[%s2] sm:$0x1]
  %v53 = vlaneseq
  %v54 = vshrl.u32 %v53, 7
  %v55 = vsub.s32 0, %v54
  %v56 = vrot.slane %v51, %v55
  %v66 = vunpack.c.l.b16 %v43
  %v67 = vunpack.c.l.b16 %v44
  %v68 = vunpack.c.l.b16 %v45
  %v69 = vunpack.c.l.b16 %v46
  %v70 = vunpack.c.l.b16 %v47
  %v71 = vunpack.c.l.b16 %v48
  %v72 = vunpack.c.l.b16 %v49
  %v73 = vunpack.c.l.b16 %v50
  %v74 = vpack.c.b16 %v67, %v66
  %v75 = vpack.c.b16 %v69, %v68
  %v76 = vpack.c.b16 %v71, %v70
  %v77 = vpack.c.b16 %v73, %v72
  %vm82 = vcmask 523264
  %v84 = vsel %vm82, %v42, 0
  %86 = vmatprep.subr.bf16.mxu0 0
  %87 = vmatpush1.bf16.msra.mxu0 %v74
  %88 = vmatprep.subr.bf16.mxu0 0
  %89 = vmatpush1.bf16.msra.mxu0 %v75
  %90 = vmatprep.subr.bf16.mxu0 0
  %91 = vmatpush1.bf16.msra.mxu0 %v76
  %92 = vmatprep.subr.bf16.mxu0 0
  %93 = vmatpush1.bf16.msra.mxu0 %v77
  %94 = vmatprep.subr.bf16.mxu0 0
  %95 = vmatpush1.bf16.msra.mxu0 0
  %96 = vmatprep.subr.bf16.mxu0 0
  %97 = vmatpush1.bf16.msra.mxu0 0
  %98 = vmatprep.subr.bf16.mxu0 0
  %99 = vmatpush1.bf16.msra.mxu0 0
  %100 = vmatprep.subr.bf16.mxu0 0
  %101 = vmatpush1.bf16.msra.mxu0 0
  %102 = vmatprep.subr.bf16.mxu0 0
  %103 = vmatpush1.bf16.msra.mxu0 0
  %104 = vmatprep.subr.bf16.mxu0 0
  %105 = vmatpush1.bf16.msra.mxu0 0
  %106 = vmatprep.subr.bf16.mxu0 0
  %107 = vmatpush1.bf16.msra.mxu0 0
  %108 = vmatprep.subr.bf16.mxu0 0
  %109 = vmatpush1.bf16.msra.mxu0 0
  %110 = vmatprep.subr.bf16.mxu0 0
  %111 = vmatpush1.bf16.msra.mxu0 0
  %112 = vmatprep.subr.bf16.mxu0 0
  %113 = vmatpush1.bf16.msra.mxu0 0
  %114 = vmatprep.subr.bf16.mxu0 0
  %115 = vmatpush1.bf16.msra.mxu0 0
  %116 = vmatprep.subr.bf16.mxu0 0
  %117 = vmatpush1.bf16.msra.mxu0 0
  %118 = vmatprep.mubr.bf16.mxu0 0
  %119 = vmatmul.mubr.bf16.gmra.mrb[0].mxu0 %v84
  %v120 = vpop.f32.mrb[0].mxu0
  %v121 = vadd.f32 %v56, %v120
  %v122 = vpop.f32.mrb[0].mxu0
  %v123 = vpop.f32.mrb[0].mxu0
  %v124 = vpop.f32.mrb[0].mxu0
  %125 = vdwg.mxu0
  %v126 = vmax.f32 %v121, 0.0
  %v127 = vpack.c.bf16 %v126, %v126
  %v128 = vld [vmem:[%s3] sm:$0xf]
  %v129 = vld [vmem:[%s3 + $0x4] sm:$0xf]
  %v130 = vld [vmem:[%s3 + $0x8] sm:$0xf]
  %v131 = vld [vmem:[%s3 + $0xc] sm:$0xf]
  %v132 = vld [vmem:[%s4] sm:$0x1]
  %v134 = vlaneseq
  %v135 = vshrl.u32 %v134, 7
  %v136 = vsub.s32 0, %v135
  %v137 = vrot.slane %v132, %v136
  %v143 = vunpack.c.l.b16 %v128
  %v144 = vunpack.c.l.b16 %v129
  %v145 = vunpack.c.l.b16 %v130
  %v146 = vunpack.c.l.b16 %v131
  %v147 = vpack.c.b16 %v144, %v143
  %v148 = vpack.c.b16 %v146, %v145
  %vm151 = vcmask 261120
  %v153 = vsel %vm151, %v127, 0
  %155 = vmatprep.subr.bf16.mxu0 0
  %156 = vmatpush1.bf16.msra.mxu0 %v147
  %157 = vmatprep.subr.bf16.mxu0 0
  %158 = vmatpush1.bf16.msra.mxu0 %v148
  %159 = vmatprep.subr.bf16.mxu0 0
  %160 = vmatpush1.bf16.msra.mxu0 0
  %161 = vmatprep.subr.bf16.mxu0 0
  %162 = vmatpush1.bf16.msra.mxu0 0
  %163 = vmatprep.subr.bf16.mxu0 0
  %164 = vmatpush1.bf16.msra.mxu0 0
  %165 = vmatprep.subr.bf16.mxu0 0
  %166 = vmatpush1.bf16.msra.mxu0 0
  %167 = vmatprep.subr.bf16.mxu0 0
  %168 = vmatpush1.bf16.msra.mxu0 0
  %169 = vmatprep.subr.bf16.mxu0 0
  %170 = vmatpush1.bf16.msra.mxu0 0
  %171 = vmatprep.subr.bf16.mxu0 0
  %172 = vmatpush1.bf16.msra.mxu0 0
  %173 = vmatprep.subr.bf16.mxu0 0
  %174 = vmatpush1.bf16.msra.mxu0 0
  %175 = vmatprep.subr.bf16.mxu0 0
  %176 = vmatpush1.bf16.msra.mxu0 0
  %177 = vmatprep.subr.bf16.mxu0 0
  %178 = vmatpush1.bf16.msra.mxu0 0
  %179 = vmatprep.subr.bf16.mxu0 0
  %180 = vmatpush1.bf16.msra.mxu0 0
  %181 = vmatprep.subr.bf16.mxu0 0
  %182 = vmatpush1.bf16.msra.mxu0 0
  %183 = vmatprep.subr.bf16.mxu0 0
  %184 = vmatpush1.bf16.msra.mxu0 0
  %185 = vmatprep.subr.bf16.mxu0 0
  %186 = vmatpush1.bf16.msra.mxu0 0
  %187 = vmatprep.mubr.bf16.mxu0 0
  %188 = vmatmul.mubr.bf16.gmra.mrb[0].mxu0 %v153
  %v189 = vpop.f32.mrb[0].mxu0
  %v190 = vadd.f32 %v137, %v189
  %v191 = vpop.f32.mrb[0].mxu0
  %v192 = vpop.f32.mrb[0].mxu0
  %v193 = vpop.f32.mrb[0].mxu0
  %194 = vdwg.mxu0
  %v195 = vmul.f32 %v190, %v190
  %vm196 = vcmask 64512
  %v197 = vsel %vm196, %v195, 0.0
  %198 = vadd.xlane.f32.xlu0 %v197
  %v199 = vpop.xlane.xlu0 %198
  %v200 = vld [vmem:[%s5] sm:$0xff]
  %v202 = vsel %vm196, %v190, 0
  %204 = vmatprep.subr.mxu0 0.0
  %205 = vmatpush1.msra.mxu0 %v200
  %206 = vmatprep.subr.mxu0 0.0
  %207 = vmatpush1.msra.mxu0 0.0
  %208 = vmatprep.subr.mxu0 0.0
  %209 = vmatpush1.msra.mxu0 0.0
  %210 = vmatprep.subr.mxu0 0.0
  %211 = vmatpush1.msra.mxu0 0.0
  %212 = vmatprep.subr.mxu0 0.0
  %213 = vmatpush1.msra.mxu0 0.0
  %214 = vmatprep.subr.mxu0 0.0
  %215 = vmatpush1.msra.mxu0 0.0
  %216 = vmatprep.subr.mxu0 0.0
  %217 = vmatpush1.msra.mxu0 0.0
  %218 = vmatprep.subr.mxu0 0.0
  %219 = vmatpush1.msra.mxu0 0.0
  %220 = vmatprep.subr.mxu0 0.0
  %221 = vmatpush1.msra.mxu0 0.0
  %222 = vmatprep.subr.mxu0 0.0
  %223 = vmatpush1.msra.mxu0 0.0
  %224 = vmatprep.subr.mxu0 0.0
  %225 = vmatpush1.msra.mxu0 0.0
  %226 = vmatprep.subr.mxu0 0.0
  %227 = vmatpush1.msra.mxu0 0.0
  %228 = vmatprep.subr.mxu0 0.0
  %229 = vmatpush1.msra.mxu0 0.0
  %230 = vmatprep.subr.mxu0 0.0
  %231 = vmatpush1.msra.mxu0 0.0
  %232 = vmatprep.subr.mxu0 0.0
  %233 = vmatpush1.msra.mxu0 0.0
  %234 = vmatprep.subr.mxu0 0.0
  %235 = vmatpush1.msra.mxu0 0.0
  %236 = vmatprep.subr.mxu0 0.0
  %237 = vmatpush1.msra.mxu0 0.0
  %238 = vmatprep.subr.mxu0 0.0
  %239 = vmatpush1.msra.mxu0 0.0
  %240 = vmatprep.subr.mxu0 0.0
  %241 = vmatpush1.msra.mxu0 0.0
  %242 = vmatprep.subr.mxu0 0.0
  %243 = vmatpush1.msra.mxu0 0.0
  %244 = vmatprep.subr.mxu0 0.0
  %245 = vmatpush1.msra.mxu0 0.0
  %246 = vmatprep.subr.mxu0 0.0
  %247 = vmatpush1.msra.mxu0 0.0
  %248 = vmatprep.subr.mxu0 0.0
  %249 = vmatpush1.msra.mxu0 0.0
  %250 = vmatprep.subr.mxu0 0.0
  %251 = vmatpush1.msra.mxu0 0.0
  %252 = vmatprep.subr.mxu0 0.0
  %253 = vmatpush1.msra.mxu0 0.0
  %254 = vmatprep.subr.mxu0 0.0
  %255 = vmatpush1.msra.mxu0 0.0
  %256 = vmatprep.subr.mxu0 0.0
  %257 = vmatpush1.msra.mxu0 0.0
  %258 = vmatprep.subr.mxu0 0.0
  %259 = vmatpush1.msra.mxu0 0.0
  %260 = vmatprep.subr.mxu0 0.0
  %261 = vmatpush1.msra.mxu0 0.0
  %262 = vmatprep.subr.mxu0 0.0
  %263 = vmatpush1.msra.mxu0 0.0
  %264 = vmatprep.subr.mxu0 0.0
  %265 = vmatpush1.msra.mxu0 0.0
  %266 = vmatprep.subr.mxu0 0.0
  %267 = vmatpush1.msra.mxu0 0.0
  %268 = vmatprep.mubr.f32.mxu0 0.0
  %269 = vmatmul.mubr.f32.gmra.mrb[0].mxu0 %v202
  %v270 = vpop.f32.mrb[0].mxu0
  %v271 = vadd.f32 0.0, %v270
  %v272 = vpop.f32.mrb[0].mxu0
  %273 = vdwg.mxu0
  %v274 = vmul.f32 %v271, 2.0
  %v275 = vsub.f32 %v199, %v274
  %v276 = vld [vmem:[%s6] sm:$0x1]
  %v278 = vlaneseq
  %v279 = vshrl.u32 %v278, 7
  %v280 = vsub.s32 0, %v279
  %v281 = vrot.slane %v276, %v280
  %v283 = vadd.f32 %v275, %v281
  %v284 = vmax.f32 %v283, 0.0
  %v285 = vadd.f32 %v284, 1.0
  %v286 = vrcp.pop %v285
  %v287 = vmul.f32 1.0, %v286
  %vm288 = vcmask 23552
  %v289 = vsel %vm288, %v287, 0.0
  %290 = vadd.xlane.f32.xlu0 %v289
  %v291 = vpop.xlane.xlu0 %290
  %v292 = vrcp.pop %v291
  %v293 = vmul.f32 %v287, %v292
  %294 = vst [vmem:[%s12] sm:$0xff] 0.0
  %295 = vst.msk [vmem:[%s12] sm:$0xff] %vm288, %v293
  %296 = vrot.lane.b32.xlu0 %v190, 3
  %v297 = vpop.permute.xlu0 %296
  %vm299 = vcmask 89112
  %300 = vst.msk [vmem:[%s12] sm:$0xff] %vm299, %v297
  %v301 = vpack.c.bf16 %v190, %v190
  %v302 = vld [vmem:[%s7] sm:$0xf]
  %v303 = vld [vmem:[%s8] sm:$0x1]
  %v305 = vlaneseq
  %v306 = vshrl.u32 %v305, 7
  %v307 = vsub.s32 0, %v306
  %v308 = vrot.slane %v303, %v307
  %v311 = vsel %vm196, %v301, 0
  %vm313 = vcmask 1043456
  %v315 = vsel %vm313, %v302, 0
  %317 = vmatprep.subr.bf16.mxu0 0
  %318 = vmatpush1.bf16.msra.mxu0 %v315
  %319 = vmatprep.subr.bf16.mxu0 0
  %320 = vmatpush1.bf16.msra.mxu0 0
  %321 = vmatprep.subr.bf16.mxu0 0
  %322 = vmatpush1.bf16.msra.mxu0 0
  %323 = vmatprep.subr.bf16.mxu0 0
  %324 = vmatpush1.bf16.msra.mxu0 0
  %325 = vmatprep.subr.bf16.mxu0 0
  %326 = vmatpush1.bf16.msra.mxu0 0
  %327 = vmatprep.subr.bf16.mxu0 0
  %328 = vmatpush1.bf16.msra.mxu0 0
  %329 = vmatprep.subr.bf16.mxu0 0
  %330 = vmatpush1.bf16.msra.mxu0 0
  %331 = vmatprep.subr.bf16.mxu0 0
  %332 = vmatpush1.bf16.msra.mxu0 0
  %333 = vmatprep.subr.bf16.mxu0 0
  %334 = vmatpush1.bf16.msra.mxu0 0
  %335 = vmatprep.subr.bf16.mxu0 0
  %336 = vmatpush1.bf16.msra.mxu0 0
  %337 = vmatprep.subr.bf16.mxu0 0
  %338 = vmatpush1.bf16.msra.mxu0 0
  %339 = vmatprep.subr.bf16.mxu0 0
  %340 = vmatpush1.bf16.msra.mxu0 0
  %341 = vmatprep.subr.bf16.mxu0 0
  %342 = vmatpush1.bf16.msra.mxu0 0
  %343 = vmatprep.subr.bf16.mxu0 0
  %344 = vmatpush1.bf16.msra.mxu0 0
  %345 = vmatprep.subr.bf16.mxu0 0
  %346 = vmatpush1.bf16.msra.mxu0 0
  %347 = vmatprep.subr.bf16.mxu0 0
  %348 = vmatpush1.bf16.msra.mxu0 0
  %349 = vmatprep.mubr.bf16.mxu0 0
  %350 = vmatmul.mubr.bf16.gmra.mrb[0].mxu0 %v311
  %v351 = vpop.f32.mrb[0].mxu0
  %v352 = vadd.f32 %v308, %v351
  %v353 = vpop.f32.mrb[0].mxu0
  %v354 = vpop.f32.mrb[0].mxu0
  %v355 = vpop.f32.mrb[0].mxu0
  %356 = vdwg.mxu0
  %v357 = vmax.f32 %v352, 0.0
  %v358 = vpack.c.bf16 %v357, %v357
  %v359 = vld [vmem:[%s9] sm:$0xf]
  %v360 = vld [vmem:[%s9 + $0x4] sm:$0xf]
  %v361 = vld [vmem:[%s9 + $0x8] sm:$0xf]
  %v362 = vld [vmem:[%s9 + $0xc] sm:$0xf]
  %v363 = vld [vmem:[%s10] sm:$0x1]
  %v365 = vlaneseq
  %v366 = vshrl.u32 %v365, 7
  %v367 = vsub.s32 0, %v366
  %v368 = vrot.slane %v363, %v367
  %v374 = vunpack.c.l.b16 %v359
  %v375 = vunpack.c.l.b16 %v360
  %v376 = vunpack.c.l.b16 %v361
  %v377 = vunpack.c.l.b16 %v362
  %v378 = vpack.c.b16 %v375, %v374
  %v379 = vpack.c.b16 %v377, %v376
  %v383 = vsel %vm151, %v358, 0
  %385 = vmatprep.subr.bf16.mxu0 0
  %386 = vmatpush1.bf16.msra.mxu0 %v378
  %387 = vmatprep.subr.bf16.mxu0 0
  %388 = vmatpush1.bf16.msra.mxu0 %v379
  %389 = vmatprep.subr.bf16.mxu0 0
  %390 = vmatpush1.bf16.msra.mxu0 0
  %391 = vmatprep.subr.bf16.mxu0 0
  %392 = vmatpush1.bf16.msra.mxu0 0
  %393 = vmatprep.subr.bf16.mxu0 0
  %394 = vmatpush1.bf16.msra.mxu0 0
  %395 = vmatprep.subr.bf16.mxu0 0
  %396 = vmatpush1.bf16.msra.mxu0 0
  %397 = vmatprep.subr.bf16.mxu0 0
  %398 = vmatpush1.bf16.msra.mxu0 0
  %399 = vmatprep.subr.bf16.mxu0 0
  %400 = vmatpush1.bf16.msra.mxu0 0
  %401 = vmatprep.subr.bf16.mxu0 0
  %402 = vmatpush1.bf16.msra.mxu0 0
  %403 = vmatprep.subr.bf16.mxu0 0
  %404 = vmatpush1.bf16.msra.mxu0 0
  %405 = vmatprep.subr.bf16.mxu0 0
  %406 = vmatpush1.bf16.msra.mxu0 0
  %407 = vmatprep.subr.bf16.mxu0 0
  %408 = vmatpush1.bf16.msra.mxu0 0
  %409 = vmatprep.subr.bf16.mxu0 0
  %410 = vmatpush1.bf16.msra.mxu0 0
  %411 = vmatprep.subr.bf16.mxu0 0
  %412 = vmatpush1.bf16.msra.mxu0 0
  %413 = vmatprep.subr.bf16.mxu0 0
  %414 = vmatpush1.bf16.msra.mxu0 0
  %415 = vmatprep.subr.bf16.mxu0 0
  %416 = vmatpush1.bf16.msra.mxu0 0
  %417 = vmatprep.mubr.bf16.mxu0 0
  %418 = vmatmul.mubr.bf16.gmra.mrb[0].mxu0 %v383
  %v419 = vpop.f32.mrb[0].mxu0
  %v420 = vadd.f32 %v368, %v419
  %v421 = vpop.f32.mrb[0].mxu0
  %v422 = vpop.f32.mrb[0].mxu0
  %v423 = vpop.f32.mrb[0].mxu0
  %424 = vdwg.mxu0
  %425 = vst [vmem:[%s11] sm:$0xff] %v420
  // Predicated region
  $region46: #{autoencoder_forward.1} parent=0 // pred_check
    _
  $region47: #{autoencoder_forward.1} parent=0 // pred_check_branch
    %427 = sbr.rel (0) target = $region49
  $region48: #{autoencoder_forward.1} parent=0 // pred_region
    _
  $region49: #{autoencoder_forward.1} parent=0 // pred_fallthru
    _
  // Predicated region
  $region50: #{autoencoder_forward.1} parent=0 // pred_check
    _
  $region51: #{autoencoder_forward.1} parent=0 // pred_check_branch
    %429 = sbr.rel (0) target = $region53
  $region52: #{autoencoder_forward.1} parent=0 // pred_region
    _
  $region53: #{autoencoder_forward.1} parent=0 // pred_fallthru
    _
  // Predicated region
  $region54: #{autoencoder_forward.1} parent=0 // pred_check
    _
  $region55: #{autoencoder_forward.1} parent=0 // pred_check_branch
    %431 = sbr.rel (0) target = $region57
  $region56: #{autoencoder_forward.1} parent=0 // pred_region
    _
  $region57: #{autoencoder_forward.1} parent=0 // pred_fallthru
    _
  // Predicated region
  $region58: #{autoencoder_forward.1} parent=0 // pred_check
    _
  $region59: #{autoencoder_forward.1} parent=0 // pred_check_branch
    %433 = sbr.rel (0) target = $region61
  $region60: #{autoencoder_forward.1} parent=0 // pred_region
    _
  $region61: #{autoencoder_forward.1} parent=0 // pred_fallthru
    _

</llo_original>
